<compile_context>
chip_gen: v5e
topology: v5e:2x2
jax: 0.10.0
libtpu: 0.0.40
codegen_flags: <defaults>
</compile_context>

<pallas_src>
import math

import numpy as np
import jax
import jax.numpy as jnp
from jax.experimental import pallas as pl
from jax.experimental.pallas import tpu as pltpu


def build_sinusoid_table(max_len: int, size: int) -> jnp.ndarray:
    """Deterministic table init, identical to the PyTorch __init__ (f64 -> f32)."""
    pos = np.arange(max_len, dtype=np.float64)[:, None]           # (max_len, 1)
    j = np.arange(size, dtype=np.float64)[None, :]                # (1, size)
    angle = pos / np.power(10000.0, 2.0 * np.floor(j / 2.0) / size)
    table = np.where((np.arange(size) % 2) == 0, np.sin(angle), np.cos(angle))
    return jnp.asarray(table, dtype=jnp.float32)                  # (max_len, size)


def _add_pe_kernel(emb_ref, pe_ref, out_ref):
    # emb_ref / out_ref: (TB, TR, C) tile.
    # pe_ref: (TR, C)     -> shared across batch (default arange path), or
    #         (TB, TR, C) -> per-batch rows (explicit-positions path).
    pe = pe_ref[...]
    if pe.ndim == 2:                      # trace-time branch; one broadcast per tile
        pe = pe[None, :, :]
    out_ref[...] = (emb_ref[...].astype(jnp.float32)
                    + pe.astype(jnp.float32)).astype(out_ref.dtype)


def sinuso_positional_encoding(emb, pe_table, positions=None, *, tile_bytes=2 << 20):
    """emb: (B, L, D); pe_table: (max_len, D) float32;
    positions: optional ints broadcastable to (B, L).
    Returns pe(positions) + emb, cast to emb.dtype."""
    B, L, D = emb.shape
    max_len = pe_table.shape[0]

    # ---- lane-dense folding decision -------------------------------------
    # Fold k consecutive rows into the lane dim so the output last dim is a
    # multiple of 128 (unmasked vst). Prefer folding within the sequence
    # (keeps pe shared across batch); otherwise fold across flattened B*L.
    k = 1
    flatten = False
    if D % 128 != 0:
        kk = 128 // math.gcd(D, 128)
        if L % kk == 0:
            k = kk
        elif (B * L) % kk == 0:
            k = kk
            flatten = True
        # else: k stays 1 (sub-128-lane stores).
        # TODO(synk): pad D up to 128 in the wrapper for narrow-D models whose
        # B*L does not divide the fold factor.

    # ---- build the pe rows fed to the kernel ------------------------------
    if positions is None:
        # torch.arange(L) default: rows 0..L-1, shared by every batch element.
        pe_rows = jax.lax.slice_in_dim(pe_table, 0, L, axis=0)     # (L, D) f32
        if flatten:
            # pe must be materialized per flattened row; cast to emb.dtype to
            # keep HBM traffic down (documented precision change).
            pe_r = jnp.broadcast_to(pe_rows[None], (B, L, D)).astype(emb.dtype)
            pe_r = pe_r.reshape((B * L) // k, D * k)
            pe_shared = True                                       # B_eff == 1
        else:
            pe_r = pe_rows.reshape(L // k, D * k)                  # f32, shared
            pe_shared = True
    else:
        positions = jnp.broadcast_to(jnp.asarray(positions, jnp.int32), (B, L))
        positions = jnp.clip(positions, 0, max_len - 1)            # bounds safety
        # Row gather stays an XLA gather; cast to emb.dtype to halve its
        # write + kernel re-read bytes for low-precision emb.
        # TODO(synk): move this gather in-kernel (VMEM-resident table + SMEM
        # positions via PrefetchScalarGridSpec) to cut traffic further.
        pe_rows = jnp.take(pe_table, positions, axis=0).astype(emb.dtype)  # (B,L,D)
        if flatten:
            pe_r = pe_rows.reshape((B * L) // k, D * k)
            pe_shared = True                                       # B_eff == 1
        else:
            pe_r = pe_rows.reshape(B, L // k, D * k)
            pe_shared = False

    if flatten:
        B_eff, R, C = 1, (B * L) // k, D * k
    else:
        B_eff, R, C = B, L // k, D * k
    emb_r = emb.reshape(B_eff, R, C)

    # ---- tile sizing -------------------------------------------------------
    itemsize = jnp.dtype(emb.dtype).itemsize
    row_bytes = C * itemsize
    max_rows = max(8, (tile_bytes // row_bytes) // 8 * 8)
    if R <= max_rows:
        TR = R                                   # full extent (may be < 8: OK)
        # whole sequence fits in one row tile -> tile across batch too so the
        # grid doesn't degenerate into B tiny steps.
        TB = max(1, min(B_eff, tile_bytes // max(1, R * row_bytes)))
    else:
        TR = max_rows                            # multiple of 8 sublanes
        TB = 1

    grid = (pl.cdiv(R, TR), pl.cdiv(B_eff, TB))  # batch innermost: pe DMA reused

    emb_spec = pl.BlockSpec((TB, TR, C), lambda t, b: (b, t, 0))
    out_spec = pl.BlockSpec((TB, TR, C), lambda t, b: (b, t, 0))
    if pe_shared:
        pe_spec = pl.BlockSpec((TR, C), lambda t, b: (t, 0))
        pe_tile_bytes = TR * C * jnp.dtype(pe_r.dtype).itemsize
    else:
        pe_spec = pl.BlockSpec((TB, TR, C), lambda t, b: (b, t, 0))
        pe_tile_bytes = TB * TR * C * jnp.dtype(pe_r.dtype).itemsize

    # Explicit scoped-VMEM budget: 2x (double-buffer) * (emb-in + pe-in + out).
    emb_tile_bytes = TB * TR * C * itemsize
    needed = 2 * (2 * emb_tile_bytes + pe_tile_bytes)
    vmem_limit = int(min(48 << 20, max(24 << 20, needed + (4 << 20))))

    out = pl.pallas_call(
        _add_pe_kernel,
        out_shape=jax.ShapeDtypeStruct((B_eff, R, C), emb.dtype),
        grid=grid,
        in_specs=[emb_spec, pe_spec],
        out_specs=out_spec,
        compiler_params=pltpu.CompilerParams(
            dimension_semantics=("parallel", "parallel"),
            vmem_limit_bytes=vmem_limit,
        ),
    )(emb_r, pe_r)
    return out.reshape(B, L, D)


if __name__ == "__main__":
    B, L, D = 2, 8, 32
    MAX_LEN = 64

    key = jax.random.PRNGKey(0)
    emb = jax.random.normal(key, (B, L, D), dtype=jnp.float32)
    pe_table = build_sinusoid_table(MAX_LEN, D)

    # 1) Default (positions=None) path: shared pe, sequence-fold, batch-tiled.
    out = jax.block_until_ready(sinuso_positional_encoding(emb, pe_table))
    ref = emb + pe_table[jnp.arange(L)][None, :, :]
    np.testing.assert_allclose(np.asarray(out), np.asarray(ref), rtol=1e-6, atol=1e-6)

    # 2) Explicit per-batch positions path.
    pos = jnp.stack([jnp.arange(L, dtype=jnp.int32),
                     jnp.arange(L, dtype=jnp.int32) + 3])
    out2 = jax.block_until_ready(sinuso_positional_encoding(emb, pe_table, pos))
    ref2 = emb + pe_table[pos]
    np.testing.assert_allclose(np.asarray(out2), np.asarray(ref2), rtol=1e-6, atol=1e-6)

    # 3) Multi-row-tile path with a partial last tile (tiny tile_bytes -> TR < R).
    emb3 = jax.random.normal(jax.random.PRNGKey(1), (1, 48, 32), dtype=jnp.float32)
    out3 = jax.block_until_ready(
        sinuso_positional_encoding(emb3, pe_table, tile_bytes=4096))
    ref3 = emb3 + pe_table[jnp.arange(48)][None, :, :]
    np.testing.assert_allclose(np.asarray(out3), np.asarray(ref3), rtol=1e-6, atol=1e-6)

    # 4) Awkward L (L % fold != 0) -> fold across flattened B*L rows, still
    #    lane-dense output.
    emb4 = jax.random.normal(jax.random.PRNGKey(2), (2, 6, 32), dtype=jnp.float32)
    out4 = jax.block_until_ready(sinuso_positional_encoding(emb4, pe_table))
    ref4 = emb4 + pe_table[jnp.arange(6)][None, :, :]
    np.testing.assert_allclose(np.asarray(out4), np.asarray(ref4), rtol=1e-6, atol=1e-6)

    print("KERNEL_OK")
</pallas_src>

<mosaic_0001>
module attributes {stable_mosaic.version = 11 : i64} {
  func.func @_add_pe_kernel(%arg0: i32, %arg1: i32, %arg2: memref<2x2x128xf32, #tpu.memory_space<vmem>>, %arg3: memref<2x128xf32, #tpu.memory_space<vmem>>, %arg4: memref<2x2x128xf32, #tpu.memory_space<vmem>>) attributes {dimension_semantics = [#tpu.dimension_semantics<parallel>, #tpu.dimension_semantics<parallel>], iteration_bounds = array<i64: 1, 1>, scalar_prefetch = 0 : i64, scratch_operands = 0 : i64, tpu.core_type = #tpu.core_type<tc>, window_params = [{transform_indices = @transform_0, window_bounds = array<i64: 2, 2, 128>}, {transform_indices = @transform_1, window_bounds = array<i64: 2, 128>}, {transform_indices = @transform_2, window_bounds = array<i64: 2, 2, 128>}]} {
    %c0 = arith.constant 0 : index
    %c0_0 = arith.constant 0 : index
    %0 = vector.load %arg3[%c0, %c0_0] : memref<2x128xf32, #tpu.memory_space<vmem>>, vector<2x128xf32>
    %1 = vector.shape_cast %0 : vector<2x128xf32> to vector<1x2x128xf32>
    %c0_1 = arith.constant 0 : index
    %c0_2 = arith.constant 0 : index
    %c0_3 = arith.constant 0 : index
    %2 = vector.load %arg2[%c0_1, %c0_2, %c0_3] : memref<2x2x128xf32, #tpu.memory_space<vmem>>, vector<2x2x128xf32>
    %3 = vector.broadcast %1 : vector<1x2x128xf32> to vector<2x2x128xf32>
    %4 = arith.addf %2, %3 : vector<2x2x128xf32>
    %c0_4 = arith.constant 0 : index
    %c0_5 = arith.constant 0 : index
    %c0_6 = arith.constant 0 : index
    %5 = vector.load %arg4[%c0_4, %c0_5, %c0_6] : memref<2x2x128xf32, #tpu.memory_space<vmem>>, vector<2x2x128xf32>
    tpu.vector_store %arg4[%c0_4, %c0_5, %c0_6], %4 {strides = array<i32>} : memref<2x2x128xf32, #tpu.memory_space<vmem>>, vector<2x2x128xf32>,
    return
  }
  func.func @transform_0(%arg0: i32, %arg1: i32) -> (i32, i32, i32) {
    %c0_i32 = arith.constant 0 : i32
    %c0_i32_0 = arith.constant 0 : i32
    return %arg1, %arg0, %c0_i32 : i32, i32, i32
  }
  func.func @transform_1(%arg0: i32, %arg1: i32) -> (i32, i32) {
    %c0_i32 = arith.constant 0 : i32
    %c0_i32_0 = arith.constant 0 : i32
    return %arg0, %c0_i32 : i32, i32
  }
  func.func @transform_2(%arg0: i32, %arg1: i32) -> (i32, i32, i32) {
    %c0_i32 = arith.constant 0 : i32
    %c0_i32_0 = arith.constant 0 : i32
    return %arg1, %arg0, %c0_i32 : i32, i32, i32
  }
}

</mosaic_0001>

<llo_original>
// kernel: tpu_custom_call.1
$region0: #{tpu_custom_call.1}
  #allocation0 [shape = 'u32[]', space=smem, size = 0x4, offset = 0x4, fixed_abs, tag = 'smem constant byte address 0x4 - core index']
  #allocation1 [shape = 'u32[72,128]{1,0:T(1,128)}', space=vmem, size = 0x9000, scoped, tag = 'internal scratch']
  %s0 = inlined_call_operand.hbm [shape: f32[2,2,128], index: 0, kind: input, shape index: {}]
  %s1 = inlined_call_operand.hbm [shape: f32[2,128], index: 1, kind: input, shape index: {}]
  %s2 = inlined_call_operand.hbm [shape: f32[2,2,128], index: 2, kind: output, shape index: {}]
  %s3 = sld [smem:[#allocation0]]
  $region26: #{tpu_custom_call.1} parent=0
    _
  %s5 = ssub.s32 1, %s3
  %s6 = scalar_select 0, %s5, %s3
  $region1: #{tpu_custom_call.1} parent=0
    #allocation2 [shape = 'u8[2048]{0}', space=vmem, size = 0x800, scoped, tag = 'input window, operand 0, single buffered']
    #allocation3 [shape = 's32[1]{0}', space=sflag, size = 0x4, scoped, tag = 'scoped memory for tpu_custom_call.1']
    #allocation4 [shape = 's32[1]{0}', space=sflag, size = 0x4, scoped, tag = 'scoped memory for tpu_custom_call.1']
    #allocation5 [shape = 'u8[1024]{0}', space=vmem, size = 0x400, scoped, tag = 'input window, operand 1, single buffered']
    #allocation6 [shape = 's32[1]{0}', space=sflag, size = 0x4, scoped, tag = 'scoped memory for tpu_custom_call.1']
    #allocation7 [shape = 'u8[2048]{0}', space=vmem, size = 0x800, scoped, tag = 'output window, operand 0, single buffered']
    %7 = vsyncpa [#allocation3], 0
    %8 = vsyncpa [#allocation6], 0
    %9 = vsyncpa [#allocation4], 0
    // Predicated region
    $region2: #{tpu_custom_call.1} parent=1 // pred_check
      _
    $region3: #{tpu_custom_call.1} parent=1 // pred_check_branch
      %11 = sbr.rel (0) target = $region5
    $region4: #{tpu_custom_call.1} parent=1 // pred_region
      %13 = vsyncadd [#allocation3], 0
      %s14 = sshll.u32 %s0, 4
      %s15 = int_to_ptr.hbm [resolvable:$true] %s14
      %s16 = sshll.u32 [#allocation2], 4
      %s17 = int_to_ptr.vmem [resolvable:$true] %s16
      %22 = dma.hbm_to_vmem [thread:$0]  %s15, 64, %s17, [#allocation3], 32, 32, 2
    $region5: #{tpu_custom_call.1} parent=1 // pred_fallthru
      _
    // Predicated region
    $region6: #{tpu_custom_call.1} parent=1 // pred_check
      _
    $region7: #{tpu_custom_call.1} parent=1 // pred_check_branch
      %24 = sbr.rel (0) target = $region9
    $region8: #{tpu_custom_call.1} parent=1 // pred_region
      %26 = vsyncadd [#allocation6], 0
      %s28 = sshll.u32 %s1, 4
      %s29 = int_to_ptr.hbm [resolvable:$true] %s28
      %s30 = sshll.u32 [#allocation5], 4
      %s31 = int_to_ptr.vmem [resolvable:$true] %s30
      %33 = dma.hbm_to_vmem [thread:$0]  %s29, 32, %s31, [#allocation6]
    $region9: #{tpu_custom_call.1} parent=1 // pred_fallthru
      _
    // Predicated region
    $region10: #{tpu_custom_call.1} parent=1 // pred_check
      _
    $region11: #{tpu_custom_call.1} parent=1 // pred_check_branch
      %35 = sbr.rel (0) target = $region13
    $region12: #{tpu_custom_call.1} parent=1 // pred_region
      %37 = dma.done [#allocation3], 64
    $region13: #{tpu_custom_call.1} parent=1 // pred_fallthru
      _
    // Predicated region
    $region14: #{tpu_custom_call.1} parent=1 // pred_check
      _
    $region15: #{tpu_custom_call.1} parent=1 // pred_check_branch
      %39 = sbr.rel (0) target = $region17
    $region16: #{tpu_custom_call.1} parent=1 // pred_region
      %41 = dma.done [#allocation6], 32
    $region17: #{tpu_custom_call.1} parent=1 // pred_fallthru
      _
    %v42 = vld [vmem:[#allocation5] sm:$0x3]
    %v43 = vld [vmem:[#allocation2] sm:$0x3]
    %v44 = vld [vmem:[#allocation2 + $0x2] sm:$0x3]
    %v45 = vadd.f32 %v43, %v42
    %v46 = vadd.f32 %v44, %v42
    %47 = vst [vmem:[#allocation7] sm:$0x3] %v45
    %48 = vst [vmem:[#allocation7 + $0x2] sm:$0x3] %v46
    // Predicated region
    $region18: #{tpu_custom_call.1} parent=1 // pred_check
      _
    $region19: #{tpu_custom_call.1} parent=1 // pred_check_branch
      %50 = sbr.rel (0) target = $region21
    $region20: #{tpu_custom_call.1} parent=1 // pred_region
      %52 = vsyncadd [#allocation4], 0
      %s53 = sshll.u32 [#allocation7], 4
      %s54 = int_to_ptr.vmem [resolvable:$true] %s53
      %s55 = sshll.u32 %s2, 4
      %s56 = int_to_ptr.hbm [resolvable:$true] %s55
      %61 = dma.vmem_to_hbm [thread:$0]  %s54, 64, %s56, [#allocation4], 32, 32, 2
    $region21: #{tpu_custom_call.1} parent=1 // pred_fallthru
      _
    // Predicated region
    $region22: #{tpu_custom_call.1} parent=1 // pred_check
      _
    $region23: #{tpu_custom_call.1} parent=1 // pred_check_branch
      %63 = sbr.rel (0) target = $region25
    $region24: #{tpu_custom_call.1} parent=1 // pred_region
      %65 = dma.done [#allocation4], 64
    $region25: #{tpu_custom_call.1} parent=1 // pred_fallthru
      _
    %66 = vsyncpa [#allocation3], 1
    %67 = vsyncpa [#allocation6], 1
    %68 = vsyncpa [#allocation4], 1

</llo_original>
